<compile_context>
chip_gen: v5e
topology: v5e:2x2
jax: 0.10.0
libtpu: 0.0.40
codegen_flags: <defaults>
</compile_context>

<pallas_src>
import math
import functools

import jax
import jax.numpy as jnp
from jax.experimental import pallas as pl
from jax.experimental.pallas import tpu as pltpu

_LANE = 128          # lane width of a vreg / MXU feed
_SUBLANE_BF16 = 16   # bf16 sublane packing


def _round_up(x, m):
    return ((x + m - 1) // m) * m


def _gelu_tanh(x):
    # PyTorch nn.GELU(approximate='tanh'):
    #   0.5 * x * (1 + tanh(sqrt(2/pi) * (x + 0.044715 * x^3)))
    c = math.sqrt(2.0 / math.pi)
    return 0.5 * x * (1.0 + jnp.tanh(c * (x + 0.044715 * x * x * x)))


def _encoder_kernel(x_ref, *refs, n_layers):
    # refs = (w0, b0, w1, b1, ..., w_{L-1}, b_{L-1}, out_ref)
    out_ref = refs[-1]
    # f32 input tile -> bf16 MXU feed; cast happens in-kernel (no wrapper pass).
    h = x_ref[...].astype(jnp.bfloat16)
    for l in range(n_layers):
        w = refs[2 * l][...]                        # bf16 [k_l, n_l]
        b = refs[2 * l + 1][...]                    # f32  [1,  n_l]
        acc = jnp.dot(h, w, preferred_element_type=jnp.float32)  # MXU, f32 acc
        a = _gelu_tanh(acc + b)                     # bias + GELU in f32 (VPU/EUP)
        if l < n_layers - 1:
            h = a.astype(jnp.bfloat16)              # bf16 feed for next matmul
        else:
            out_ref[...] = a.astype(out_ref.dtype)  # real-width f32 store


def prepare_encoder_params(params):
    """Pad/cast parameters to their in-kernel layout ONCE (not per call).

    params: list of (W, b) with W: [in, out], b: [out], float32.
    Returns list of (W_p bf16 [k_pad, n_pad], b_p f32 [1, n_pad]) where hidden
    dims are padded to 128 lanes; the first layer's K stays at the real
    input_dim (the input is fed unpadded) and the last layer's N stays at the
    real bottleneck_dim (the output is written at its real width).
    """
    n_layers = len(params)
    prepared = []
    prev = params[0][0].shape[0]                    # real input_dim
    for l, (W, b) in enumerate(params):
        di, do = W.shape
        k = prev
        n_out = do if l == n_layers - 1 else _round_up(do, _LANE)
        W_p = jnp.zeros((k, n_out), jnp.bfloat16)
        W_p = W_p.at[:di, :do].set(W.astype(jnp.bfloat16))
        b_p = jnp.zeros((1, n_out), jnp.float32)
        b_p = b_p.at[0, :do].set(b.astype(jnp.float32))
        prepared.append((W_p, b_p))
        prev = n_out
    return prepared


def encoder_forward(x, prepared_params, *, batch_tile=1024):
    """Run the fused MLP encoder as a single Pallas TPU kernel.

    x:               [B, input_dim] float32 (fed unpadded, cast to bf16 in-kernel)
    prepared_params: output of prepare_encoder_params()
    Returns:         [B, bottleneck_dim] float32
    """
    B, in_dim = x.shape
    n_layers = len(prepared_params)
    out_dim = prepared_params[-1][0].shape[1]
    assert prepared_params[0][0].shape[0] == in_dim

    # --- batch tile: large (amortize per-step overhead), multiple of 16 ---
    bt = min(batch_tile, _round_up(B, _SUBLANE_BF16))
    bt = _round_up(bt, _SUBLANE_BF16)
    # v7x megacore: ensure >=2 grid steps when that still leaves >=512-row
    # tiles, so the "parallel" batch axis can be split across both TCs.
    half = _round_up(-(-B // 2), _SUBLANE_BF16)
    if bt >= B and half >= 512:
        bt = min(bt, half)
    grid = (pl.cdiv(B, bt),)   # ragged B: partial last block handled by Pallas

    # --- specs: x tiled on batch only; params resident (constant index) ---
    in_specs = [pl.BlockSpec((bt, in_dim), lambda i: (i, 0))]
    flat_args = []
    for (W_p, b_p) in prepared_params:
        flat_args.append(W_p)
        in_specs.append(pl.BlockSpec(W_p.shape, lambda i: (0, 0)))
        flat_args.append(b_p)
        in_specs.append(pl.BlockSpec(b_p.shape, lambda i: (0, 0)))
    out_spec = pl.BlockSpec((bt, out_dim), lambda i: (i, 0))

    # --- VMEM budget: double-buffered I/O tiles + params + f32 intermediates
    #     + compiler scratch headroom; capped below v7x's 64 MiB physical VMEM.
    x_bytes = bt * in_dim * 4
    out_bytes = bt * out_dim * 4
    param_bytes = sum(int(a.size) * a.dtype.itemsize for a in flat_args)
    act_bytes = sum(bt * W_p.shape[1] * 4 for (W_p, _) in prepared_params)
    vmem_limit = 2 * (x_bytes + out_bytes) + 2 * param_bytes + 2 * act_bytes + (8 << 20)
    vmem_limit = int(min(vmem_limit, 48 << 20))

    kernel = functools.partial(_encoder_kernel, n_layers=n_layers)

    return pl.pallas_call(
        kernel,
        out_shape=jax.ShapeDtypeStruct((B, out_dim), jnp.float32),
        grid_spec=pltpu.PrefetchScalarGridSpec(
            num_scalar_prefetch=0,
            grid=grid,
            in_specs=in_specs,
            out_specs=out_spec,
        ),
        compiler_params=pltpu.CompilerParams(
            dimension_semantics=("parallel",),   # batch axis: megacore-shardable
            vmem_limit_bytes=vmem_limit,
        ),
    )(x, *flat_args)


def init_encoder_params(key, input_dim, hidden_dims, bottleneck_dim):
    """Deterministic init matching nn.Linear shapes (W stored as [in, out])."""
    dims = [input_dim] + list(hidden_dims) + [bottleneck_dim]
    params = []
    for i in range(len(dims) - 1):
        key, kw, kb = jax.random.split(key, 3)
        fan_in = dims[i]
        bound = 1.0 / math.sqrt(fan_in)  # PyTorch nn.Linear uniform bound
        W = jax.random.uniform(kw, (dims[i], dims[i + 1]),
                               minval=-bound, maxval=bound, dtype=jnp.float32)
        b = jax.random.uniform(kb, (dims[i + 1],),
                               minval=-bound, maxval=bound, dtype=jnp.float32)
        params.append((W, b))
    return params


def encoder_reference(x, params):
    h = x
    for (W, b) in params:
        h = _gelu_tanh(h @ W + b)
    return h


if __name__ == "__main__":
    # Shapes consistent with the module: Encoder(input_dim=32,
    # hidden_dims=[64, 32], bottleneck_dim=16).
    key = jax.random.PRNGKey(0)
    key, kx, kx2 = jax.random.split(key, 3)

    input_dim = 32
    hidden_dims = (64, 32)
    bottleneck_dim = 16

    raw_params = init_encoder_params(key, input_dim, hidden_dims, bottleneck_dim)
    params = prepare_encoder_params(raw_params)   # pad/cast once, reused per call

    # Small ragged batch (8 rows -> one partial 16-row block): exercises the
    # partial-last-block path (OOB input rows don't-care, OOB writes dropped).
    batch = 8
    x = jax.random.normal(kx, (batch, input_dim), dtype=jnp.float32)
    out = jax.block_until_ready(encoder_forward(x, params))
    ref = encoder_reference(x, raw_params)
    assert out.shape == (batch, bottleneck_dim), out.shape
    assert jnp.allclose(out, ref, atol=3e-2, rtol=3e-2), \
        float(jnp.max(jnp.abs(out - ref)))

    # Larger ragged batch with a forced smaller tile: grid > 1 (pipelining /
    # megacore path) plus a partial final block (600 = 2*256 + 88).
    batch2 = 600
    x2 = jax.random.normal(kx2, (batch2, input_dim), dtype=jnp.float32)
    out2 = jax.block_until_ready(encoder_forward(x2, params, batch_tile=256))
    ref2 = encoder_reference(x2, raw_params)
    assert out2.shape == (batch2, bottleneck_dim), out2.shape
    assert jnp.allclose(out2, ref2, atol=3e-2, rtol=3e-2), \
        float(jnp.max(jnp.abs(out2 - ref2)))

    print("KERNEL_OK")
</pallas_src>

<mosaic_0001>
module attributes {stable_mosaic.version = 11 : i64} {
  func.func @_encoder_kernel(%arg0: i32, %arg1: memref<16x32xf32, #tpu.memory_space<vmem>>, %arg2: memref<32x128xbf16, #tpu.memory_space<vmem>>, %arg3: memref<1x128xf32, #tpu.memory_space<vmem>>, %arg4: memref<128x128xbf16, #tpu.memory_space<vmem>>, %arg5: memref<1x128xf32, #tpu.memory_space<vmem>>, %arg6: memref<128x16xbf16, #tpu.memory_space<vmem>>, %arg7: memref<1x16xf32, #tpu.memory_space<vmem>>, %arg8: memref<16x16xf32, #tpu.memory_space<vmem>>) attributes {dimension_semantics = [#tpu.dimension_semantics<parallel>], iteration_bounds = array<i64: 1>, scalar_prefetch = 0 : i64, scratch_operands = 0 : i64, tpu.core_type = #tpu.core_type<tc>, window_params = [{transform_indices = @transform_0, window_bounds = array<i64: 16, 32>}, {pipeline_mode = #tpu.pipeline_mode<synchronous>, transform_indices = @transform_1, window_bounds = array<i64: 32, 128>}, {pipeline_mode = #tpu.pipeline_mode<synchronous>, transform_indices = @transform_2, window_bounds = array<i64: 1, 128>}, {pipeline_mode = #tpu.pipeline_mode<synchronous>, transform_indices = @transform_3, window_bounds = array<i64: 128, 128>}, {pipeline_mode = #tpu.pipeline_mode<synchronous>, transform_indices = @transform_4, window_bounds = array<i64: 1, 128>}, {pipeline_mode = #tpu.pipeline_mode<synchronous>, transform_indices = @transform_5, window_bounds = array<i64: 128, 16>}, {pipeline_mode = #tpu.pipeline_mode<synchronous>, transform_indices = @transform_6, window_bounds = array<i64: 1, 16>}, {transform_indices = @transform_7, window_bounds = array<i64: 16, 16>}]} {
    %c0 = arith.constant 0 : index
    %c0_0 = arith.constant 0 : index
    %0 = vector.load %arg1[%c0, %c0_0] : memref<16x32xf32, #tpu.memory_space<vmem>>, vector<16x32xf32>
    %1 = arith.truncf %0 : vector<16x32xf32> to vector<16x32xbf16>
    %c0_1 = arith.constant 0 : index
    %c0_2 = arith.constant 0 : index
    %2 = vector.load %arg2[%c0_1, %c0_2] : memref<32x128xbf16, #tpu.memory_space<vmem>>, vector<32x128xbf16>
    %c0_3 = arith.constant 0 : index
    %c0_4 = arith.constant 0 : index
    %3 = vector.load %arg3[%c0_3, %c0_4] : memref<1x128xf32, #tpu.memory_space<vmem>>, vector<1x128xf32>
    %cst = arith.constant dense<0.000000e+00> : vector<16x128xf32>
    %4 = tpu.matmul %1, %2, %cst {dimension_numbers = #tpu.dot_dimension_numbers<[1], [0], [0], [1], [0, 0, 1, 1], [], []>} : vector<16x32xbf16>, vector<32x128xbf16>, vector<16x128xf32> -> vector<16x128xf32>
    %5 = vector.broadcast %3 : vector<1x128xf32> to vector<16x128xf32>
    %6 = arith.addf %4, %5 : vector<16x128xf32>
    %cst_5 = arith.constant 5.000000e-01 : f32
    %7 = vector.broadcast %cst_5 : f32 to vector<16x128xf32>
    %8 = arith.mulf %7, %6 : vector<16x128xf32>
    %cst_6 = arith.constant 4.471500e-02 : f32
    %9 = vector.broadcast %cst_6 : f32 to vector<16x128xf32>
    %10 = arith.mulf %9, %6 : vector<16x128xf32>
    %11 = arith.mulf %10, %6 : vector<16x128xf32>
    %12 = arith.mulf %11, %6 : vector<16x128xf32>
    %13 = arith.addf %6, %12 : vector<16x128xf32>
    %cst_7 = arith.constant 0.797884583 : f32
    %14 = vector.broadcast %cst_7 : f32 to vector<16x128xf32>
    %15 = arith.mulf %14, %13 : vector<16x128xf32>
    %16 = math.tanh %15 : vector<16x128xf32>
    %cst_8 = arith.constant 1.000000e+00 : f32
    %17 = vector.broadcast %cst_8 : f32 to vector<16x128xf32>
    %18 = arith.addf %17, %16 : vector<16x128xf32>
    %19 = arith.mulf %8, %18 : vector<16x128xf32>
    %20 = arith.truncf %19 : vector<16x128xf32> to vector<16x128xbf16>
    %c0_9 = arith.constant 0 : index
    %c0_10 = arith.constant 0 : index
    %21 = vector.load %arg4[%c0_9, %c0_10] : memref<128x128xbf16, #tpu.memory_space<vmem>>, vector<128x128xbf16>
    %c0_11 = arith.constant 0 : index
    %c0_12 = arith.constant 0 : index
    %22 = vector.load %arg5[%c0_11, %c0_12] : memref<1x128xf32, #tpu.memory_space<vmem>>, vector<1x128xf32>
    %cst_13 = arith.constant dense<0.000000e+00> : vector<16x128xf32>
    %23 = tpu.matmul %20, %21, %cst_13 {dimension_numbers = #tpu.dot_dimension_numbers<[1], [0], [0], [1], [0, 0, 1, 1], [], []>} : vector<16x128xbf16>, vector<128x128xbf16>, vector<16x128xf32> -> vector<16x128xf32>
    %24 = vector.broadcast %22 : vector<1x128xf32> to vector<16x128xf32>
    %25 = arith.addf %23, %24 : vector<16x128xf32>
    %cst_14 = arith.constant 5.000000e-01 : f32
    %26 = vector.broadcast %cst_14 : f32 to vector<16x128xf32>
    %27 = arith.mulf %26, %25 : vector<16x128xf32>
    %cst_15 = arith.constant 4.471500e-02 : f32
    %28 = vector.broadcast %cst_15 : f32 to vector<16x128xf32>
    %29 = arith.mulf %28, %25 : vector<16x128xf32>
    %30 = arith.mulf %29, %25 : vector<16x128xf32>
    %31 = arith.mulf %30, %25 : vector<16x128xf32>
    %32 = arith.addf %25, %31 : vector<16x128xf32>
    %cst_16 = arith.constant 0.797884583 : f32
    %33 = vector.broadcast %cst_16 : f32 to vector<16x128xf32>
    %34 = arith.mulf %33, %32 : vector<16x128xf32>
    %35 = math.tanh %34 : vector<16x128xf32>
    %cst_17 = arith.constant 1.000000e+00 : f32
    %36 = vector.broadcast %cst_17 : f32 to vector<16x128xf32>
    %37 = arith.addf %36, %35 : vector<16x128xf32>
    %38 = arith.mulf %27, %37 : vector<16x128xf32>
    %39 = arith.truncf %38 : vector<16x128xf32> to vector<16x128xbf16>
    %c0_18 = arith.constant 0 : index
    %c0_19 = arith.constant 0 : index
    %40 = vector.load %arg6[%c0_18, %c0_19] : memref<128x16xbf16, #tpu.memory_space<vmem>>, vector<128x16xbf16>
    %c0_20 = arith.constant 0 : index
    %c0_21 = arith.constant 0 : index
    %41 = vector.load %arg7[%c0_20, %c0_21] : memref<1x16xf32, #tpu.memory_space<vmem>>, vector<1x16xf32>
    %cst_22 = arith.constant dense<0.000000e+00> : vector<16x16xf32>
    %42 = tpu.matmul %39, %40, %cst_22 {dimension_numbers = #tpu.dot_dimension_numbers<[1], [0], [0], [1], [0, 0, 1, 1], [], []>} : vector<16x128xbf16>, vector<128x16xbf16>, vector<16x16xf32> -> vector<16x16xf32>
    %43 = vector.broadcast %41 : vector<1x16xf32> to vector<16x16xf32>
    %44 = arith.addf %42, %43 : vector<16x16xf32>
    %cst_23 = arith.constant 5.000000e-01 : f32
    %45 = vector.broadcast %cst_23 : f32 to vector<16x16xf32>
    %46 = arith.mulf %45, %44 : vector<16x16xf32>
    %cst_24 = arith.constant 4.471500e-02 : f32
    %47 = vector.broadcast %cst_24 : f32 to vector<16x16xf32>
    %48 = arith.mulf %47, %44 : vector<16x16xf32>
    %49 = arith.mulf %48, %44 : vector<16x16xf32>
    %50 = arith.mulf %49, %44 : vector<16x16xf32>
    %51 = arith.addf %44, %50 : vector<16x16xf32>
    %cst_25 = arith.constant 0.797884583 : f32
    %52 = vector.broadcast %cst_25 : f32 to vector<16x16xf32>
    %53 = arith.mulf %52, %51 : vector<16x16xf32>
    %54 = math.tanh %53 : vector<16x16xf32>
    %cst_26 = arith.constant 1.000000e+00 : f32
    %55 = vector.broadcast %cst_26 : f32 to vector<16x16xf32>
    %56 = arith.addf %55, %54 : vector<16x16xf32>
    %57 = arith.mulf %46, %56 : vector<16x16xf32>
    %c0_27 = arith.constant 0 : index
    %c0_28 = arith.constant 0 : index
    %58 = vector.load %arg8[%c0_27, %c0_28] : memref<16x16xf32, #tpu.memory_space<vmem>>, vector<16x16xf32>
    tpu.vector_store %arg8[%c0_27, %c0_28], %57 {strides = array<i32>} : memref<16x16xf32, #tpu.memory_space<vmem>>, vector<16x16xf32>,
    return
  }
  func.func @transform_0(%arg0: i32) -> (i32, i32) {
    %c0_i32 = arith.constant 0 : i32
    %c0_i32_0 = arith.constant 0 : i32
    return %arg0, %c0_i32 : i32, i32
  }
  func.func @transform_1(%arg0: i32) -> (i32, i32) {
    %c0_i32 = arith.constant 0 : i32
    %c0_i32_0 = arith.constant 0 : i32
    %c0_i32_1 = arith.constant 0 : i32
    return %c0_i32, %c0_i32_0 : i32, i32
  }
  func.func @transform_2(%arg0: i32) -> (i32, i32) {
    %c0_i32 = arith.constant 0 : i32
    %c0_i32_0 = arith.constant 0 : i32
    %c0_i32_1 = arith.constant 0 : i32
    return %c0_i32, %c0_i32_0 : i32, i32
  }
  func.func @transform_3(%arg0: i32) -> (i32, i32) {
    %c0_i32 = arith.constant 0 : i32
    %c0_i32_0 = arith.constant 0 : i32
    %c0_i32_1 = arith.constant 0 : i32
    return %c0_i32, %c0_i32_0 : i32, i32
  }
  func.func @transform_4(%arg0: i32) -> (i32, i32) {
    %c0_i32 = arith.constant 0 : i32
    %c0_i32_0 = arith.constant 0 : i32
    %c0_i32_1 = arith.constant 0 : i32
    return %c0_i32, %c0_i32_0 : i32, i32
  }
  func.func @transform_5(%arg0: i32) -> (i32, i32) {
    %c0_i32 = arith.constant 0 : i32
    %c0_i32_0 = arith.constant 0 : i32
    %c0_i32_1 = arith.constant 0 : i32
    return %c0_i32, %c0_i32_0 : i32, i32
  }
  func.func @transform_6(%arg0: i32) -> (i32, i32) {
    %c0_i32 = arith.constant 0 : i32
    %c0_i32_0 = arith.constant 0 : i32
    %c0_i32_1 = arith.constant 0 : i32
    return %c0_i32, %c0_i32_0 : i32, i32
  }
  func.func @transform_7(%arg0: i32) -> (i32, i32) {
    %c0_i32 = arith.constant 0 : i32
    %c0_i32_0 = arith.constant 0 : i32
    return %arg0, %c0_i32 : i32, i32
  }
}

</mosaic_0001>

<llo_original>
// kernel: tpu_custom_call.1
$region0: #{tpu_custom_call.1}
  #allocation0 [shape = 'u32[]', space=smem, size = 0x4, offset = 0x4, fixed_abs, tag = 'smem constant byte address 0x4 - core index']
  #allocation1 [shape = 'u32[72,128]{1,0:T(1,128)}', space=vmem, size = 0x9000, scoped, tag = 'internal scratch']
  %s0 = inlined_call_operand.vmem [shape: f32[8,32], index: 0, kind: input, shape index: {}]
  %s1 = inlined_call_operand.hbm [shape: bf16[32,128], index: 1, kind: input, shape index: {}]
  %s2 = inlined_call_operand.vmem [shape: f32[1,128], index: 2, kind: input, shape index: {}]
  %s3 = inlined_call_operand.vmem [shape: bf16[128,128], index: 3, kind: input, shape index: {}]
  %s4 = inlined_call_operand.vmem [shape: f32[1,128], index: 4, kind: input, shape index: {}]
  %s5 = inlined_call_operand.vmem [shape: bf16[128,16], index: 5, kind: input, shape index: {}]
  %s6 = inlined_call_operand.vmem [shape: f32[1,16], index: 6, kind: input, shape index: {}]
  %s7 = inlined_call_operand.hbm [shape: f32[8,16], index: 7, kind: output, shape index: {}]
  %s8 = sld [smem:[#allocation0]]
  $region42: #{tpu_custom_call.1} parent=0
    _
  %s10 = ssub.s32 1, %s8
  %s11 = scalar_select 0, %s10, %s8
  $region1: #{tpu_custom_call.1} parent=0
    #allocation2 [shape = 'u8[8192]{0}', space=vmem, size = 0x2000, scoped, tag = 'input window, operand 1, single buffered']
    #allocation3 [shape = 's32[1]{0}', space=sflag, size = 0x4, scoped, tag = 'scoped memory for tpu_custom_call.1']
    #allocation4 [shape = 's32[1]{0}', space=sflag, size = 0x4, scoped, tag = 'scoped memory for tpu_custom_call.1']
    #allocation5 [shape = 'u8[8192]{0}', space=vmem, size = 0x2000, scoped, tag = 'output window, operand 0, single buffered']
    %12 = vsyncpa [#allocation3], 0
    %13 = vsyncpa [#allocation4], 0
    // Predicated region
    $region2: #{tpu_custom_call.1} parent=1 // pred_check
      _
    $region3: #{tpu_custom_call.1} parent=1 // pred_check_branch
      %15 = sbr.rel (0) target = $region5
    $region4: #{tpu_custom_call.1} parent=1 // pred_region
      _
    $region5: #{tpu_custom_call.1} parent=1 // pred_fallthru
      _
    // Predicated region
    $region6: #{tpu_custom_call.1} parent=1 // pred_check
      _
    $region7: #{tpu_custom_call.1} parent=1 // pred_check_branch
      %17 = sbr.rel (0) target = $region9
    $region8: #{tpu_custom_call.1} parent=1 // pred_region
      %19 = vsyncadd [#allocation3], 0
      %s20 = sshll.u32 %s1, 4
      %s21 = int_to_ptr.hbm [resolvable:$true] %s20
      %s22 = sshll.u32 [#allocation2], 4
      %s23 = int_to_ptr.vmem [resolvable:$true] %s22
      %28 = dma.hbm_to_vmem [thread:$0]  %s21, 256, %s23, [#allocation3], 64, 64, 4
    $region9: #{tpu_custom_call.1} parent=1 // pred_fallthru
      _
    // Predicated region
    $region10: #{tpu_custom_call.1} parent=1 // pred_check
      _
    $region11: #{tpu_custom_call.1} parent=1 // pred_check_branch
      %30 = sbr.rel (0) target = $region13
    $region12: #{tpu_custom_call.1} parent=1 // pred_region
      _
    $region13: #{tpu_custom_call.1} parent=1 // pred_fallthru
      _
    // Predicated region
    $region14: #{tpu_custom_call.1} parent=1 // pred_check
      _
    $region15: #{tpu_custom_call.1} parent=1 // pred_check_branch
      %32 = sbr.rel (0) target = $region17
    $region16: #{tpu_custom_call.1} parent=1 // pred_region
      _
    $region17: #{tpu_custom_call.1} parent=1 // pred_fallthru
      _
    // Predicated region
    $region18: #{tpu_custom_call.1} parent=1 // pred_check
      _
    $region19: #{tpu_custom_call.1} parent=1 // pred_check_branch
      %34 = sbr.rel (0) target = $region21
    $region20: #{tpu_custom_call.1} parent=1 // pred_region
      _
    $region21: #{tpu_custom_call.1} parent=1 // pred_fallthru
      _
    // Predicated region
    $region22: #{tpu_custom_call.1} parent=1 // pred_check
      _
    $region23: #{tpu_custom_call.1} parent=1 // pred_check_branch
      %36 = sbr.rel (0) target = $region25
    $region24: #{tpu_custom_call.1} parent=1 // pred_region
      _
    $region25: #{tpu_custom_call.1} parent=1 // pred_fallthru
      _
    // Predicated region
    $region26: #{tpu_custom_call.1} parent=1 // pred_check
      _
    $region27: #{tpu_custom_call.1} parent=1 // pred_check_branch
      %38 = sbr.rel (0) target = $region29
    $region28: #{tpu_custom_call.1} parent=1 // pred_region
      _
    $region29: #{tpu_custom_call.1} parent=1 // pred_fallthru
      _
    // Predicated region
    $region30: #{tpu_custom_call.1} parent=1 // pred_check
      _
    $region31: #{tpu_custom_call.1} parent=1 // pred_check_branch
      %40 = sbr.rel (0) target = $region33
    $region32: #{tpu_custom_call.1} parent=1 // pred_region
      %42 = dma.done [#allocation3], 256
    $region33: #{tpu_custom_call.1} parent=1 // pred_fallthru
      _
    %v44 = vld [vmem:[%s0] sm:$0xff]
    %v45 = vld [vmem:[%s0 + $0x8] sm:$0xff]
    %v46 = vpack.c.bf16 %v45, %v44
    %v47 = vld [vmem:[#allocation2] sm:$0xf]
    %v48 = vld [vmem:[#allocation2 + $0x4] sm:$0xf]
    %v49 = vld [vmem:[#allocation2 + $0x8] sm:$0xf]
    %v50 = vld [vmem:[#allocation2 + $0xc] sm:$0xf]
    %v51 = vld [vmem:[%s2] sm:$0x1]
    %v53 = vperm.slane %v51, 0
    %v59 = vunpack.c.l.b16 %v47
    %v60 = vunpack.c.l.b16 %v48
    %v61 = vunpack.c.l.b16 %v49
    %v62 = vunpack.c.l.b16 %v50
    %v63 = vpack.c.b16 %v60, %v59
    %v64 = vpack.c.b16 %v62, %v61
    %vm67 = vcmask 261120
    %v69 = vsel %vm67, %v46, 0
    %71 = vmatpush.bf16.msra.mxu0 0
    %72 = vmatpush.bf16.msra.mxu0 0
    %73 = vmatpush.bf16.msra.mxu0 0
    %74 = vmatpush.bf16.msra.mxu0 0
    %75 = vmatpush.bf16.msra.mxu0 0
    %76 = vmatpush.bf16.msra.mxu0 0
    %77 = vmatpush.bf16.msra.mxu0 %v64
    %78 = vmatpush.bf16.msra.mxu0 %v63
    %79 = vmatmul.bf16.gmra.mxu0 %v69
    %v80 = vpop.f32.mrf.mxu0
    %v81 = vadd.f32 %v53, %v80
    %v82 = vpop.f32.mrf.mxu0
    %v83 = vadd.f32 %v53, %v82
    %84 = vdwg.mxu0
    %v85 = vmul.f32 %v81, 0.5
    %v86 = vmul.f32 %v83, 0.5
    %v87 = vmul.f32 %v81, 0.044715
    %v88 = vmul.f32 %v83, 0.044715
    %v89 = vmul.f32 %v87, %v81
    %v90 = vmul.f32 %v88, %v83
    %v91 = vmul.f32 %v89, %v81
    %v92 = vmul.f32 %v90, %v83
    %v93 = vadd.f32 %v81, %v91
    %v94 = vadd.f32 %v83, %v92
    %v95 = vmul.f32 %v93, 0.7978846
    %v96 = vmul.f32 %v94, 0.7978846
    %v97 = vtanh.pop %v95
    %v98 = vtanh.pop %v96
    %v99 = vadd.f32 %v97, 1.0
    %v100 = vadd.f32 %v98, 1.0
    %v101 = vmul.f32 %v85, %v99
    %v102 = vmul.f32 %v86, %v100
    %v103 = vpack.c.bf16 %v102, %v101
    %v104 = vld [vmem:[%s3] sm:$0xf]
    %v105 = vld [vmem:[%s3 + $0x4] sm:$0xf]
    %v106 = vld [vmem:[%s3 + $0x8] sm:$0xf]
    %v107 = vld [vmem:[%s3 + $0xc] sm:$0xf]
    %v108 = vld [vmem:[%s3 + $0x10] sm:$0xf]
    %v109 = vld [vmem:[%s3 + $0x14] sm:$0xf]
    %v110 = vld [vmem:[%s3 + $0x18] sm:$0xf]
    %v111 = vld [vmem:[%s3 + $0x1c] sm:$0xf]
    %v112 = vld [vmem:[%s3 + $0x20] sm:$0xf]
    %v113 = vld [vmem:[%s3 + $0x24] sm:$0xf]
    %v114 = vld [vmem:[%s3 + $0x28] sm:$0xf]
    %v115 = vld [vmem:[%s3 + $0x2c] sm:$0xf]
    %v116 = vld [vmem:[%s3 + $0x30] sm:$0xf]
    %v117 = vld [vmem:[%s3 + $0x34] sm:$0xf]
    %v118 = vld [vmem:[%s3 + $0x38] sm:$0xf]
    %v119 = vld [vmem:[%s3 + $0x3c] sm:$0xf]
    %v120 = vld [vmem:[%s4] sm:$0x1]
    %v122 = vperm.slane %v120, 0
    %v140 = vunpack.c.l.b16 %v104
    %v141 = vunpack.c.l.b16 %v105
    %v142 = vunpack.c.l.b16 %v106
    %v143 = vunpack.c.l.b16 %v107
    %v144 = vunpack.c.l.b16 %v108
    %v145 = vunpack.c.l.b16 %v109
    %v146 = vunpack.c.l.b16 %v110
    %v147 = vunpack.c.l.b16 %v111
    %v148 = vunpack.c.l.b16 %v112
    %v149 = vunpack.c.l.b16 %v113
    %v150 = vunpack.c.l.b16 %v114
    %v151 = vunpack.c.l.b16 %v115
    %v152 = vunpack.c.l.b16 %v116
    %v153 = vunpack.c.l.b16 %v117
    %v154 = vunpack.c.l.b16 %v118
    %v155 = vunpack.c.l.b16 %v119
    %v156 = vpack.c.b16 %v141, %v140
    %v157 = vpack.c.b16 %v143, %v142
    %v158 = vpack.c.b16 %v145, %v144
    %v159 = vpack.c.b16 %v147, %v146
    %v160 = vpack.c.b16 %v149, %v148
    %v161 = vpack.c.b16 %v151, %v150
    %v162 = vpack.c.b16 %v153, %v152
    %v163 = vpack.c.b16 %v155, %v154
    %172 = vmatpush.bf16.msra.mxu0 %v163
    %173 = vmatpush.bf16.msra.mxu0 %v162
    %174 = vmatpush.bf16.msra.mxu0 %v161
    %175 = vmatpush.bf16.msra.mxu0 %v160
    %176 = vmatpush.bf16.msra.mxu0 %v159
    %177 = vmatpush.bf16.msra.mxu0 %v158
    %178 = vmatpush.bf16.msra.mxu0 %v157
    %179 = vmatpush.bf16.msra.mxu0 %v156
    %180 = vmatmul.bf16.gmra.mxu0 %v103
    %v181 = vpop.f32.mrf.mxu0
    %v182 = vadd.f32 %v122, %v181
    %v183 = vpop.f32.mrf.mxu0
    %v184 = vadd.f32 %v122, %v183
    %185 = vdwg.mxu0
    %v186 = vmul.f32 %v182, 0.5
    %v187 = vmul.f32 %v184, 0.5
    %v188 = vmul.f32 %v182, 0.044715
    %v189 = vmul.f32 %v184, 0.044715
    %v190 = vmul.f32 %v188, %v182
    %v191 = vmul.f32 %v189, %v184
    %v192 = vmul.f32 %v190, %v182
    %v193 = vmul.f32 %v191, %v184
    %v194 = vadd.f32 %v182, %v192
    %v195 = vadd.f32 %v184, %v193
    %v196 = vmul.f32 %v194, 0.7978846
    %v197 = vmul.f32 %v195, 0.7978846
    %v198 = vtanh.pop %v196
    %v199 = vtanh.pop %v197
    %v200 = vadd.f32 %v198, 1.0
    %v201 = vadd.f32 %v199, 1.0
    %v202 = vmul.f32 %v186, %v200
    %v203 = vmul.f32 %v187, %v201
    %v204 = vpack.c.bf16 %v203, %v202
    %v205 = vld [vmem:[%s5] sm:$0xf]
    %v206 = vld [vmem:[%s5 + $0x4] sm:$0xf]
    %v207 = vld [vmem:[%s5 + $0x8] sm:$0xf]
    %v208 = vld [vmem:[%s5 + $0xc] sm:$0xf]
    %v209 = vld [vmem:[%s5 + $0x10] sm:$0xf]
    %v210 = vld [vmem:[%s5 + $0x14] sm:$0xf]
    %v211 = vld [vmem:[%s5 + $0x18] sm:$0xf]
    %v212 = vld [vmem:[%s5 + $0x1c] sm:$0xf]
    %v213 = vld [vmem:[%s5 + $0x20] sm:$0xf]
    %v214 = vld [vmem:[%s5 + $0x24] sm:$0xf]
    %v215 = vld [vmem:[%s5 + $0x28] sm:$0xf]
    %v216 = vld [vmem:[%s5 + $0x2c] sm:$0xf]
    %v217 = vld [vmem:[%s5 + $0x30] sm:$0xf]
    %v218 = vld [vmem:[%s5 + $0x34] sm:$0xf]
    %v219 = vld [vmem:[%s5 + $0x38] sm:$0xf]
    %v220 = vld [vmem:[%s5 + $0x3c] sm:$0xf]
    %v221 = vld [vmem:[%s6] sm:$0x1]
    %v223 = vperm.slane %v221, 0
    %v241 = vunpack.c.l.b16 %v205
    %v242 = vunpack.c.l.b16 %v206
    %v243 = vunpack.c.l.b16 %v207
    %v244 = vunpack.c.l.b16 %v208
    %v245 = vunpack.c.l.b16 %v209
    %v246 = vunpack.c.l.b16 %v210
    %v247 = vunpack.c.l.b16 %v211
    %v248 = vunpack.c.l.b16 %v212
    %v249 = vunpack.c.l.b16 %v213
    %v250 = vunpack.c.l.b16 %v214
    %v251 = vunpack.c.l.b16 %v215
    %v252 = vunpack.c.l.b16 %v216
    %v253 = vunpack.c.l.b16 %v217
    %v254 = vunpack.c.l.b16 %v218
    %v255 = vunpack.c.l.b16 %v219
    %v256 = vunpack.c.l.b16 %v220
    %v257 = vpack.c.b16 %v242, %v241
    %v258 = vpack.c.b16 %v244, %v243
    %v259 = vpack.c.b16 %v246, %v245
    %v260 = vpack.c.b16 %v248, %v247
    %v261 = vpack.c.b16 %v250, %v249
    %v262 = vpack.c.b16 %v252, %v251
    %v263 = vpack.c.b16 %v254, %v253
    %v264 = vpack.c.b16 %v256, %v255
    %273 = vmatpush.bf16.msra.mxu0 %v264
    %274 = vmatpush.bf16.msra.mxu0 %v263
    %275 = vmatpush.bf16.msra.mxu0 %v262
    %276 = vmatpush.bf16.msra.mxu0 %v261
    %277 = vmatpush.bf16.msra.mxu0 %v260
    %278 = vmatpush.bf16.msra.mxu0 %v259
    %279 = vmatpush.bf16.msra.mxu0 %v258
    %280 = vmatpush.bf16.msra.mxu0 %v257
    %281 = vmatmul.bf16.gmra.mxu0 %v204
    %v282 = vpop.f32.mrf.mxu0
    %v283 = vadd.f32 %v223, %v282
    %v284 = vpop.f32.mrf.mxu0
    %v285 = vadd.f32 %v223, %v284
    %286 = vdwg.mxu0
    %v287 = vmul.f32 %v283, 0.5
    %v288 = vmul.f32 %v285, 0.5
    %v289 = vmul.f32 %v283, 0.044715
    %v290 = vmul.f32 %v285, 0.044715
    %v291 = vmul.f32 %v289, %v283
    %v292 = vmul.f32 %v290, %v285
    %v293 = vmul.f32 %v291, %v283
    %v294 = vmul.f32 %v292, %v285
    %v295 = vadd.f32 %v283, %v293
    %v296 = vadd.f32 %v285, %v294
    %v297 = vmul.f32 %v295, 0.7978846
    %v298 = vmul.f32 %v296, 0.7978846
    %v299 = vtanh.pop %v297
    %v300 = vtanh.pop %v298
    %v301 = vadd.f32 %v299, 1.0
    %v302 = vadd.f32 %v300, 1.0
    %v303 = vmul.f32 %v287, %v301
    %v304 = vmul.f32 %v288, %v302
    %vm305 = vcmask 130048
    %306 = vst.msk [vmem:[#allocation5] sm:$0xff] %vm305, %v303
    %307 = vst.msk [vmem:[#allocation5 + $0x8] sm:$0xff] %vm305, %v304
    // Predicated region
    $region34: #{tpu_custom_call.1} parent=1 // pred_check
      _
    $region35: #{tpu_custom_call.1} parent=1 // pred_check_branch
      %309 = sbr.rel (0) target = $region37
    $region36: #{tpu_custom_call.1} parent=1 // pred_region
      %311 = vsyncadd [#allocation4], 128
      %s312 = sshll.u32 [#allocation5], 4
      %s313 = int_to_ptr.vmem [resolvable:$true] %s312
      %s314 = sshll.u32 %s7, 4
      %s315 = int_to_ptr.hbm [resolvable:$true] %s314
      %320 = dma.vmem_to_hbm [thread:$0]  %s313, 128, %s315, [#allocation4], 128, 128, 8
    $region37: #{tpu_custom_call.1} parent=1 // pred_fallthru
      _
    // Predicated region
    $region38: #{tpu_custom_call.1} parent=1 // pred_check
      _
    $region39: #{tpu_custom_call.1} parent=1 // pred_check_branch
      %322 = sbr.rel (0) target = $region41
    $region40: #{tpu_custom_call.1} parent=1 // pred_region
      %324 = dma.done [#allocation4], 256
    $region41: #{tpu_custom_call.1} parent=1 // pred_fallthru
      _
    %325 = vsyncpa [#allocation3], 1
    %326 = vsyncpa [#allocation4], 1

</llo_original>
